<compile_context>
chip_gen: v7x
topology: tpu7x:2x2x1
jax: 0.10.0
libtpu: 0.0.40
codegen_flags: <defaults>
</compile_context>

<pallas_src>
import math

import jax
import jax.numpy as jnp
from jax.experimental import pallas as pl
from jax.experimental.pallas import tpu as pltpu

_LANE = 128
_SMALL_MAX = 8192   # per-stat element count handled by the single-shot path
_TR_CAP = 1024      # rows per block in the tiled path: 1024*128*4 B = 512 KiB/slab


# ---------------------------------------------------------------------------
# Fast path: everything fits in VMEM, single kernel invocation, no grid.
# ---------------------------------------------------------------------------
def _accuracy_whole_kernel(tp_ref, fp_ref, fn_ref, tn_ref, o_ref):
    tp_s = jnp.sum(tp_ref[...])
    fp_s = jnp.sum(fp_ref[...])
    fn_s = jnp.sum(fn_ref[...])
    tn_s = jnp.sum(tn_ref[...])
    num = (tp_s + tn_s).astype(jnp.float32)
    den = (tp_s + fp_s + fn_s + tn_s).astype(jnp.float32)
    # smp's zero_division="warn" policy maps NaN (0/0) -> 0.
    o_ref[0, 0] = jnp.where(den > 0, num / den, jnp.float32(0.0))


def _accuracy_small(tp, fp, fn, tn):
    # (1, n) lane vectors: free reshape for contiguous inputs and keeps the
    # kernel rank-agnostic.  Counts are integers, so int32 sums are exact.
    args = [jnp.reshape(x, (1, -1)).astype(jnp.int32) for x in (tp, fp, fn, tn)]
    out = pl.pallas_call(
        _accuracy_whole_kernel,
        out_shape=jax.ShapeDtypeStruct((1, 1), jnp.float32),
        in_specs=[pl.BlockSpec(memory_space=pltpu.MemorySpace.VMEM)] * 4,
        out_specs=pl.BlockSpec(memory_space=pltpu.MemorySpace.SMEM),
    )(*args)
    return out[0, 0]


# ---------------------------------------------------------------------------
# Tiled fallback for large stat tensors: 1-D reduction grid, SMEM accumulator.
# ---------------------------------------------------------------------------
def _accuracy_tiled_kernel(num_ref, rest_ref, o_ref, acc_ref):
    """num_ref holds [tp | tn] rows, rest_ref holds [fp | fn] rows (zero-padded).

    num_ref/rest_ref: (tr, 128) int32 VMEM blocks (sublane/lane dense).
    o_ref:            (1, 1) float32 SMEM scalar output.
    acc_ref:          (2,)  int32 SMEM running sums: [numerator, fp+fn].
    """
    j = pl.program_id(0)

    @pl.when(j == 0)
    def _init():
        acc_ref[0] = jnp.int32(0)
        acc_ref[1] = jnp.int32(0)

    acc_ref[0] += jnp.sum(num_ref[...])    # partial sum of tp + tn (exact int32)
    acc_ref[1] += jnp.sum(rest_ref[...])   # partial sum of fp + fn

    @pl.when(j == pl.num_programs(0) - 1)
    def _finalize():
        num = acc_ref[0].astype(jnp.float32)
        den = (acc_ref[0] + acc_ref[1]).astype(jnp.float32)
        o_ref[0, 0] = jnp.where(den > 0, num / den, jnp.float32(0.0))


def _accuracy_tiled(tp, fp, fn, tn):
    # Two slabs: numerator stats and the remaining stats.  Zero padding is
    # harmless to the sums.
    # TODO(synk): if total counts can exceed 2^31, switch the accumulator to a
    # two-limb int32 (or int64) scheme.
    num_flat = jnp.concatenate([jnp.ravel(tp), jnp.ravel(tn)]).astype(jnp.int32)
    rest_flat = jnp.concatenate([jnp.ravel(fp), jnp.ravel(fn)]).astype(jnp.int32)
    m = num_flat.shape[0]

    if m <= _TR_CAP * _LANE:
        rows_needed = (m + _LANE - 1) // _LANE
        tr = max(8, ((rows_needed + 7) // 8) * 8)   # sublane-dense block rows
    else:
        tr = _TR_CAP
    blk = tr * _LANE
    padded = ((m + blk - 1) // blk) * blk
    if padded != m:
        num_flat = jnp.pad(num_flat, (0, padded - m))
        rest_flat = jnp.pad(rest_flat, (0, padded - m))
    rows = padded // _LANE
    num_slab = num_flat.reshape(rows, _LANE)
    rest_slab = rest_flat.reshape(rows, _LANE)

    out = pl.pallas_call(
        _accuracy_tiled_kernel,
        out_shape=jax.ShapeDtypeStruct((1, 1), jnp.float32),
        grid=(rows // tr,),
        in_specs=[pl.BlockSpec((tr, _LANE), lambda j: (j, 0)),
                  pl.BlockSpec((tr, _LANE), lambda j: (j, 0))],
        out_specs=pl.BlockSpec(memory_space=pltpu.MemorySpace.SMEM),
        scratch_shapes=[pltpu.SMEM((2,), jnp.int32)],
        compiler_params=pltpu.CompilerParams(
            dimension_semantics=("arbitrary",),
        ),
    )(num_slab, rest_slab)
    return out[0, 0]


def accuracy_micro(tp, fp, fn, tn):
    """Pallas implementation of smp.metrics.accuracy(tp, fp, fn, tn, reduction='micro')."""
    assert tp.shape == fp.shape == fn.shape == tn.shape
    n = math.prod(tp.shape) if tp.shape else 1
    if n <= _SMALL_MAX:
        return _accuracy_small(tp, fp, fn, tn)
    return _accuracy_tiled(tp, fp, fn, tn)


if __name__ == "__main__":
    key = jax.random.PRNGKey(0)
    k_tp, k_fp, k_fn, k_tn = jax.random.split(key, 4)

    batch, num_classes = 2, 4  # small stat tensors, as produced by smp.get_stats
    tp = jax.random.randint(k_tp, (batch, num_classes), 0, 100, dtype=jnp.int32)
    fp = jax.random.randint(k_fp, (batch, num_classes), 0, 100, dtype=jnp.int32)
    fn = jax.random.randint(k_fn, (batch, num_classes), 0, 100, dtype=jnp.int32)
    tn = jax.random.randint(k_tn, (batch, num_classes), 0, 100, dtype=jnp.int32)

    # Pure-JAX reference (micro reduction then ratio: int sums, f32 divide).
    tp_s, fp_s, fn_s, tn_s = (jnp.sum(x) for x in (tp, fp, fn, tn))
    ref = (tp_s + tn_s).astype(jnp.float32) / (
        tp_s + fp_s + fn_s + tn_s
    ).astype(jnp.float32)

    # Fast (single-shot) path — the one the dispatcher picks for these shapes.
    result = jax.block_until_ready(accuracy_micro(tp, fp, fn, tn))
    assert jnp.allclose(result, ref, rtol=1e-6, atol=1e-6), (result, ref)

    # Also exercise the tiled fallback on the same data to validate it.
    result_tiled = jax.block_until_ready(_accuracy_tiled(tp, fp, fn, tn))
    assert jnp.allclose(result_tiled, ref, rtol=1e-6, atol=1e-6), (result_tiled, ref)

    print("KERNEL_OK")
</pallas_src>

<mosaic_0001>
module attributes {stable_mosaic.version = 11 : i64} {
  func.func @_accuracy_whole_kernel(%arg0: memref<1x8xi32, #tpu.memory_space<vmem>>, %arg1: memref<1x8xi32, #tpu.memory_space<vmem>>, %arg2: memref<1x8xi32, #tpu.memory_space<vmem>>, %arg3: memref<1x8xi32, #tpu.memory_space<vmem>>, %arg4: memref<1x1xf32, #tpu.memory_space<smem>>) attributes {dimension_semantics = [], scalar_prefetch = 0 : i64, scratch_operands = 0 : i64, tpu.core_type = #tpu.core_type<tc>} {
    %c0 = arith.constant 0 : index
    %c0_0 = arith.constant 0 : index
    %0 = vector.load %arg0[%c0, %c0_0] : memref<1x8xi32, #tpu.memory_space<vmem>>, vector<1x8xi32>
    %1 = vector.shape_cast %0 : vector<1x8xi32> to vector<1x1x8xi32>
    %cst = arith.constant dense<0> : vector<1xi32>
    %2 = vector.multi_reduction <add>, %1, %cst [1, 2] : vector<1x1x8xi32> to vector<1xi32>
    %3 = vector.shape_cast %2 : vector<1xi32> to vector<1x1x1xi32>
    %4 = vector.extract %3[0, 0, 0] : i32 from vector<1x1x1xi32>
    %c0_1 = arith.constant 0 : index
    %c0_2 = arith.constant 0 : index
    %5 = vector.load %arg1[%c0_1, %c0_2] : memref<1x8xi32, #tpu.memory_space<vmem>>, vector<1x8xi32>
    %6 = vector.shape_cast %5 : vector<1x8xi32> to vector<1x1x8xi32>
    %cst_3 = arith.constant dense<0> : vector<1xi32>
    %7 = vector.multi_reduction <add>, %6, %cst_3 [1, 2] : vector<1x1x8xi32> to vector<1xi32>
    %8 = vector.shape_cast %7 : vector<1xi32> to vector<1x1x1xi32>
    %9 = vector.extract %8[0, 0, 0] : i32 from vector<1x1x1xi32>
    %c0_4 = arith.constant 0 : index
    %c0_5 = arith.constant 0 : index
    %10 = vector.load %arg2[%c0_4, %c0_5] : memref<1x8xi32, #tpu.memory_space<vmem>>, vector<1x8xi32>
    %11 = vector.shape_cast %10 : vector<1x8xi32> to vector<1x1x8xi32>
    %cst_6 = arith.constant dense<0> : vector<1xi32>
    %12 = vector.multi_reduction <add>, %11, %cst_6 [1, 2] : vector<1x1x8xi32> to vector<1xi32>
    %13 = vector.shape_cast %12 : vector<1xi32> to vector<1x1x1xi32>
    %14 = vector.extract %13[0, 0, 0] : i32 from vector<1x1x1xi32>
    %c0_7 = arith.constant 0 : index
    %c0_8 = arith.constant 0 : index
    %15 = vector.load %arg3[%c0_7, %c0_8] : memref<1x8xi32, #tpu.memory_space<vmem>>, vector<1x8xi32>
    %16 = vector.shape_cast %15 : vector<1x8xi32> to vector<1x1x8xi32>
    %cst_9 = arith.constant dense<0> : vector<1xi32>
    %17 = vector.multi_reduction <add>, %16, %cst_9 [1, 2] : vector<1x1x8xi32> to vector<1xi32>
    %18 = vector.shape_cast %17 : vector<1xi32> to vector<1x1x1xi32>
    %19 = vector.extract %18[0, 0, 0] : i32 from vector<1x1x1xi32>
    %20 = arith.addi %4, %19 : i32
    %21 = arith.sitofp %20 : i32 to f32
    %22 = arith.addi %4, %9 : i32
    %23 = arith.addi %22, %14 : i32
    %24 = arith.addi %23, %19 : i32
    %25 = arith.sitofp %24 : i32 to f32
    %cst_10 = arith.constant 0.000000e+00 : f32
    %26 = arith.cmpf ogt, %25, %cst_10 : f32
    %27 = arith.divf %21, %25 : f32
    %cst_11 = arith.constant 0.000000e+00 : f32
    %28 = arith.select %26, %27, %cst_11 : f32
    %c0_12 = arith.constant 0 : index
    %c0_13 = arith.constant 0 : index
    %29 = memref.load %arg4[%c0_12, %c0_13] : memref<1x1xf32, #tpu.memory_space<smem>>
    memref.store %28, %arg4[%c0_12, %c0_13] : memref<1x1xf32, #tpu.memory_space<smem>>
    return
  }
}

</mosaic_0001>

<llo_original>
// kernel: tpu_custom_call.1
$region0: #{tpu_custom_call.1}
  #allocation0 [shape = 'u32[]', space=smem, size = 0x4, offset = 0x4, fixed_abs, tag = 'smem constant byte address 0x4 - core index']
  #allocation1 [shape = 'u32[144,128]{1,0:T(1,128)}', space=vmem, size = 0x12000, scoped, tag = 'internal scratch']
  %s0 = inlined_call_operand.hbm [shape: s32[1,8], index: 0, kind: input, shape index: {}]
  %s1 = inlined_call_operand.vmem [shape: s32[1,8], index: 1, kind: input, shape index: {}]
  %s2 = inlined_call_operand.vmem [shape: s32[1,8], index: 2, kind: input, shape index: {}]
  %s3 = inlined_call_operand.vmem [shape: s32[1,8], index: 3, kind: input, shape index: {}]
  %s4 = inlined_call_operand.hbm [shape: f32[1,1], index: 4, kind: output, shape index: {}]
  %s5 = sld [smem:[#allocation0]]
  $region30: #{tpu_custom_call.1} parent=0
    _
  %s7 = ssub.s32 1, %s5
  %s8 = scalar_select 0, %s7, %s5
  $region1: #{tpu_custom_call.1} parent=0
    #allocation2 [shape = 'u8[512]{0}', space=vmem, size = 0x400, scoped, tag = 'input window, operand 0, single buffered']
    #allocation3 [shape = 's32[1]{0}', space=sflag, size = 0x4, scoped, tag = 'scoped memory for tpu_custom_call.1']
    #allocation4 [shape = 's32[1]{0}', space=sflag, size = 0x4, scoped, tag = 'scoped memory for tpu_custom_call.1']
    #allocation5 [shape = 'u8[512]{0}', space=smem, size = 0x200, scoped, tag = 'output window, operand 0, single buffered']
    %9 = vsyncpa [#allocation3], 0
    %10 = vsyncpa [#allocation4], 0
    // Predicated region
    $region2: #{tpu_custom_call.1} parent=1 // pred_check
      _
    $region3: #{tpu_custom_call.1} parent=1 // pred_check_branch
      %12 = sbr.rel (0) target = $region5
    $region4: #{tpu_custom_call.1} parent=1 // pred_region
      %s14 = ssub.s32 16, 16
      %15 = vsyncadd [#allocation3], %s14
      %s17 = sshll.u32 [#allocation2], 4
      %s18 = int_to_ptr.vmem [resolvable:$true] %s17
      %20 = dma.hbm_to_vmem [thread:$0]  %s0, 16, %s18, [#allocation3]
    $region5: #{tpu_custom_call.1} parent=1 // pred_fallthru
      _
    // Predicated region
    $region6: #{tpu_custom_call.1} parent=1 // pred_check
      _
    $region7: #{tpu_custom_call.1} parent=1 // pred_check_branch
      %22 = sbr.rel (0) target = $region9
    $region8: #{tpu_custom_call.1} parent=1 // pred_region
      _
    $region9: #{tpu_custom_call.1} parent=1 // pred_fallthru
      _
    // Predicated region
    $region10: #{tpu_custom_call.1} parent=1 // pred_check
      _
    $region11: #{tpu_custom_call.1} parent=1 // pred_check_branch
      %24 = sbr.rel (0) target = $region13
    $region12: #{tpu_custom_call.1} parent=1 // pred_region
      _
    $region13: #{tpu_custom_call.1} parent=1 // pred_fallthru
      _
    // Predicated region
    $region14: #{tpu_custom_call.1} parent=1 // pred_check
      _
    $region15: #{tpu_custom_call.1} parent=1 // pred_check_branch
      %26 = sbr.rel (0) target = $region17
    $region16: #{tpu_custom_call.1} parent=1 // pred_region
      _
    $region17: #{tpu_custom_call.1} parent=1 // pred_fallthru
      _
    // Predicated region
    $region18: #{tpu_custom_call.1} parent=1 // pred_check
      _
    $region19: #{tpu_custom_call.1} parent=1 // pred_check_branch
      %28 = sbr.rel (0) target = $region21
    $region20: #{tpu_custom_call.1} parent=1 // pred_region
      %29 = dma.done [#allocation3], 16
    $region21: #{tpu_custom_call.1} parent=1 // pred_fallthru
      _
    %v30 = vld [vmem:[#allocation2] sm:$0x1]
    %vm31 = vcmask 57344
    %v32 = vsel %vm31, %v30, 0
    %v33 = vand.u32 %v32, 65535
    %v34 = vshrl.u32 %v32, 16
    %v35 = vcvt.s32.f32 %v33
    %v36 = vcvt.s32.f32 %v34
    %37 = vadd.xlane.f32.xlu0 %v35
    %v38 = vpop.xlane.xlu0 %37
    %39 = vadd.xlane.f32.xlu0 %v36
    %v40 = vpop.xlane.xlu0 %39
    %v41 = vcvt.f32.s32 %v38
    %v42 = vcvt.f32.s32 %v40
    %v43 = vshll.u32 %v42, 16
    %v44 = vadd.s32 %v43, %v41
    %v45 = vrot.slane %v44, 4
    %v46 = vadd.s32 %v44, %v45
    %v47 = vrot.slane %v46, 2
    %v48 = vadd.s32 %v46, %v47
    %v49 = vrot.slane %v48, 1
    %v50 = vadd.s32 %v48, %v49
    %s51 = vtos %v50
    %v52 = vld [vmem:[%s1] sm:$0x1]
    %v53 = vsel %vm31, %v52, 0
    %v54 = vand.u32 %v53, 65535
    %v55 = vshrl.u32 %v53, 16
    %v56 = vcvt.s32.f32 %v54
    %v57 = vcvt.s32.f32 %v55
    %58 = vadd.xlane.f32.xlu0 %v56
    %v59 = vpop.xlane.xlu0 %58
    %60 = vadd.xlane.f32.xlu0 %v57
    %v61 = vpop.xlane.xlu0 %60
    %v62 = vcvt.f32.s32 %v59
    %v63 = vcvt.f32.s32 %v61
    %v64 = vshll.u32 %v63, 16
    %v65 = vadd.s32 %v64, %v62
    %v66 = vrot.slane %v65, 4
    %v67 = vadd.s32 %v65, %v66
    %v68 = vrot.slane %v67, 2
    %v69 = vadd.s32 %v67, %v68
    %v70 = vrot.slane %v69, 1
    %v71 = vadd.s32 %v69, %v70
    %s72 = vtos %v71
    %v73 = vld [vmem:[%s2] sm:$0x1]
    %v74 = vsel %vm31, %v73, 0
    %v75 = vand.u32 %v74, 65535
    %v76 = vshrl.u32 %v74, 16
    %v77 = vcvt.s32.f32 %v75
    %v78 = vcvt.s32.f32 %v76
    %79 = vadd.xlane.f32.xlu0 %v77
    %v80 = vpop.xlane.xlu0 %79
    %81 = vadd.xlane.f32.xlu0 %v78
    %v82 = vpop.xlane.xlu0 %81
    %v83 = vcvt.f32.s32 %v80
    %v84 = vcvt.f32.s32 %v82
    %v85 = vshll.u32 %v84, 16
    %v86 = vadd.s32 %v85, %v83
    %v87 = vrot.slane %v86, 4
    %v88 = vadd.s32 %v86, %v87
    %v89 = vrot.slane %v88, 2
    %v90 = vadd.s32 %v88, %v89
    %v91 = vrot.slane %v90, 1
    %v92 = vadd.s32 %v90, %v91
    %s93 = vtos %v92
    %v94 = vld [vmem:[%s3] sm:$0x1]
    %v95 = vsel %vm31, %v94, 0
    %v96 = vand.u32 %v95, 65535
    %v97 = vshrl.u32 %v95, 16
    %v98 = vcvt.s32.f32 %v96
    %v99 = vcvt.s32.f32 %v97
    %100 = vadd.xlane.f32.xlu0 %v98
    %v101 = vpop.xlane.xlu0 %100
    %102 = vadd.xlane.f32.xlu0 %v99
    %v103 = vpop.xlane.xlu0 %102
    %v104 = vcvt.f32.s32 %v101
    %v105 = vcvt.f32.s32 %v103
    %v106 = vshll.u32 %v105, 16
    %v107 = vadd.s32 %v106, %v104
    %v108 = vrot.slane %v107, 4
    %v109 = vadd.s32 %v107, %v108
    %v110 = vrot.slane %v109, 2
    %v111 = vadd.s32 %v109, %v110
    %v112 = vrot.slane %v111, 1
    %v113 = vadd.s32 %v111, %v112
    %s114 = vtos %v113
    %s115 = sadd.s32 %s51, %s114
    %s116 = scvt.s32.f32 %s115
    %s117 = sadd.s32 %s51, %s72
    %s118 = sadd.s32 %s117, %s93
    %s119 = sadd.s32 %s118, %s114
    %s120 = scvt.s32.f32 %s119
    %p121 = scmp.gt.s32.totalorder %s119, 0
    %v122 = vstv %s120
    %v123 = vrcp.pop %v122
    %s124 = vtos %v123
    %s125 = smul.f32 %s116, %s124
    %s126 = scalar_select %p121, %s125, 0.0
    %s127 = scalar_lea.smem [#allocation5], 0
    %128 = sst [smem:[%s127]] %s126
    // Predicated region
    $region22: #{tpu_custom_call.1} parent=1 // pred_check
      _
    $region23: #{tpu_custom_call.1} parent=1 // pred_check_branch
      %130 = sbr.rel (0) target = $region25
    $region24: #{tpu_custom_call.1} parent=1 // pred_region
      %s132 = ssub.s32 16, 16
      %133 = vsyncadd [#allocation4], %s132
      %136 = dma.smem_to_hbm [#allocation5], 16, %s4, [#allocation4]
    $region25: #{tpu_custom_call.1} parent=1 // pred_fallthru
      _
    // Predicated region
    $region26: #{tpu_custom_call.1} parent=1 // pred_check
      _
    $region27: #{tpu_custom_call.1} parent=1 // pred_check_branch
      %138 = sbr.rel (0) target = $region29
    $region28: #{tpu_custom_call.1} parent=1 // pred_region
      %139 = dma.done [#allocation4], 16
    $region29: #{tpu_custom_call.1} parent=1 // pred_fallthru
      _
    %140 = sfence
    %141 = vsyncpa [#allocation3], 1
    %142 = vsyncpa [#allocation4], 1

</llo_original>
